<compile_context>
chip_gen: v7x
topology: tpu7x:2x2x1
jax: 0.10.0
libtpu: 0.0.40
codegen_flags: <defaults>
</compile_context>

<pallas_src>
import numpy as np
import jax
import jax.numpy as jnp
from jax import lax
from jax.experimental import pallas as pl
from jax.experimental.pallas import tpu as pltpu

# ----- small shapes consistent with the module's forward -----
NUM_ATOM = 16
ATOM_PERIOD = 0.32
PATCH_SIZE = 4
DOWN_SAMPLE_RATE = 8

PX_PER_ATOM = round(ATOM_PERIOD * 50)                            # 16
SOURCE_PER_ATOM = round(50 * ATOM_PERIOD // DOWN_SAMPLE_RATE)    # 2
H = round(NUM_ATOM * ATOM_PERIOD * 50)                           # 256
W_IN = NUM_ATOM * SOURCE_PER_ATOM                                # 32
W_OUT = H                                                        # 256


# ---------------------------------------------------------------------------
# static geometry: row-span / column-index logic copied from the PyTorch forward
# ---------------------------------------------------------------------------
def row_span(i, j):
    ps2 = PATCH_SIZE // 2
    spa2 = SOURCE_PER_ATOM // 2
    if i >= ps2 + 1 and i < NUM_ATOM - ps2 - 1:
        row_start = (i - ps2) * PX_PER_ATOM + (j - spa2) * DOWN_SAMPLE_RATE
        row_end = row_start + PATCH_SIZE * PX_PER_ATOM
    elif i < ps2 + 1:
        required_patch = min(i + ps2 + 1, NUM_ATOM)
        opt_idx = required_patch + 1
        if i == ps2 and j > spa2:
            row_start = (j - spa2) * DOWN_SAMPLE_RATE
        else:
            row_start = 0
        row_end = opt_idx * PX_PER_ATOM - PX_PER_ATOM + (j - spa2) * DOWN_SAMPLE_RATE
    elif i == NUM_ATOM - ps2 - 1 and j < spa2:
        row_end = NUM_ATOM * PX_PER_ATOM - (spa2 - j) * DOWN_SAMPLE_RATE
        row_start = row_end - PATCH_SIZE * PX_PER_ATOM
    else:
        required_patch = NUM_ATOM - i + ps2
        opt_idx = required_patch + 1
        row_end = NUM_ATOM * PX_PER_ATOM
        row_start = (row_end - opt_idx * PX_PER_ATOM + PX_PER_ATOM
                     + (j - spa2) * DOWN_SAMPLE_RATE)
    return row_start, row_end


def build_static_ab():
    """Host-side static tables (angle-addition form).

    Returns (H, 2*W_IN) float32:
      columns [0, W_IN)      : A = mag * cos(static_phase)
      columns [W_IN, 2*W_IN) : B = mag * sin(static_phase)
    zero outside each (i, j) row span (acts as the scatter mask).
    """
    a = np.zeros((H, W_IN), np.float32)
    b = np.zeros((H, W_IN), np.float32)
    for i in range(NUM_ATOM):
        for j in range(SOURCE_PER_ATOM):
            rs, re = row_span(i, j)
            length = re - rs
            col = i * SOURCE_PER_ATOM + j
            t = np.arange(length, dtype=np.float32)
            mag = np.exp(-0.5 * ((t - length / 2.0) / (length / 4.0 + 1.0)) ** 2)
            ph = 0.05 * t + 0.3 * j + 0.1 * i
            a[rs:re, col] = mag * np.cos(ph)
            b[rs:re, col] = mag * np.sin(ph)
    return np.concatenate([a, b], axis=1)                       # (H, 2*W_IN)


def bilinear_weight_matrix(out_size, in_size):
    # F.interpolate(mode='bilinear', align_corners=False) 1-D weight matrix.
    scale = in_size / out_size
    w = np.zeros((out_size, in_size), dtype=np.float32)
    for d in range(out_size):
        src = (d + 0.5) * scale - 0.5
        if src < 0:
            src = 0.0
        x0 = min(int(np.floor(src)), in_size - 1)
        x1 = min(x0 + 1, in_size - 1)
        l1 = src - x0
        l0 = 1.0 - l1
        w[d, x0] += l0
        w[d, x1] += l1
    return w


# ---------------------------------------------------------------------------
# pure-JAX reference of the same synthetic forward (used only for the check)
# ---------------------------------------------------------------------------
def synthetic_response(level_set_knots, i, j, length, sharpness):
    center = level_set_knots[2 * i + 1]
    t = jnp.arange(length, dtype=jnp.float32)
    phase = sharpness * center * 0.5 + 0.05 * t + 0.3 * j + 0.1 * i
    mag = jnp.exp(-0.5 * ((t - length / 2.0) / (length / 4.0 + 1.0)) ** 2)
    return mag * jnp.cos(phase), mag * jnp.sin(phase)


def assemble_total_response_reference(pillar_ls_knots, sharpness):
    total_ls_knot = -0.05 * jnp.ones(2 * NUM_ATOM + 1, dtype=jnp.float32)
    level_set_knots = total_ls_knot.at[1::2].set(pillar_ls_knots)
    total_r = jnp.zeros((H, W_IN), dtype=jnp.float32)
    total_i = jnp.zeros((H, W_IN), dtype=jnp.float32)
    for i in range(NUM_ATOM):
        for j in range(SOURCE_PER_ATOM):
            rs, re = row_span(i, j)
            rr, ri = synthetic_response(level_set_knots, i, j, re - rs, sharpness)
            col = i * SOURCE_PER_ATOM + j
            total_r = total_r.at[rs:re, col].add(rr)
            total_i = total_i.at[rs:re, col].add(ri)
    return total_r, total_i


# ---------------------------------------------------------------------------
# fused Pallas kernel: [A|B] @ [cd*wt, sd*wt ; -sd*wt, cd*wt]  + max-|.| norm
# ---------------------------------------------------------------------------
def fused_kernel(ab_ref, rhs_ref, out_r_ref, out_i_ref):
    # One bf16 MXU matmul, f32 accumulation: (H, 2*W_IN) @ (2*W_IN, 2*W_OUT).
    y = jnp.dot(ab_ref[...], rhs_ref[...],
                preferred_element_type=jnp.float32)               # (H, 2*W_OUT)
    yr = y[:, :W_OUT]                                             # real plane
    yi = y[:, W_OUT:]                                             # imag plane

    # Global max |response|: max of squared magnitude, one EUP rsqrt.
    m2 = jnp.max(yr * yr + yi * yi)
    inv = lax.rsqrt(jnp.maximum(m2, jnp.float32(1e-30)))          # guard m2 == 0

    out_r_ref[...] = yr * inv
    out_i_ref[...] = yi * inv


# Static tables are parameter-independent; build + upload once at module init.
_AB_NP = build_static_ab()                                        # (H, 2*W_IN) f32
_WT_NP = bilinear_weight_matrix(W_OUT, W_IN).T                    # (W_IN, W_OUT) f32
_AB_DEV = jax.device_put(jnp.asarray(_AB_NP, dtype=jnp.bfloat16))
_WT_DEV = jax.device_put(jnp.asarray(_WT_NP, dtype=jnp.float32))

_VMEM_SPEC = pl.BlockSpec(memory_space=pltpu.MemorySpace.VMEM)

_fused_call = pl.pallas_call(
    fused_kernel,
    out_shape=(jax.ShapeDtypeStruct((H, W_OUT), jnp.float32),
               jax.ShapeDtypeStruct((H, W_OUT), jnp.float32)),
    in_specs=[_VMEM_SPEC, _VMEM_SPEC],
    out_specs=(_VMEM_SPEC, _VMEM_SPEC),
)


def _forward_impl(pillar_ls_knots, sharpness):
    # Dynamic per-column phase center: 0.5 * sharpness * knot[i], replicated
    # per source-offset column.  Only 32 cos/sin here; they are folded into
    # the bilinear weight matrix as a diagonal scaling (angle addition).
    centers = 0.5 * jnp.asarray(sharpness, jnp.float32) * pillar_ls_knots.astype(jnp.float32)
    centers = jnp.repeat(centers, SOURCE_PER_ATOM)                # (W_IN,)
    cd = jnp.cos(centers)[:, None]                                # (W_IN, 1)
    sd = jnp.sin(centers)[:, None]
    wt = _WT_DEV                                                  # (W_IN, W_OUT)
    rhs = jnp.concatenate(
        [jnp.concatenate([cd * wt, sd * wt], axis=1),
         jnp.concatenate([-sd * wt, cd * wt], axis=1)],
        axis=0).astype(jnp.bfloat16)                              # (2*W_IN, 2*W_OUT)

    zr, zi = _fused_call(_AB_DEV, rhs)
    return zr + 1j * zi                                           # complex64


# jit so the constant tables stay device-resident and the repeat/cos/sin/
# concat + complex assembly fuse into one dispatch with the pallas call.
patch_metalens_forward = jax.jit(_forward_impl)


if __name__ == "__main__":
    key = jax.random.PRNGKey(0)
    # build_param (LUT is None path): -0.05 + 0.01 * randn(num_atom)
    pillar_ls_knots = -0.05 + 0.01 * jax.random.normal(
        key, (NUM_ATOM,), dtype=jnp.float32)
    sharpness = 256.0

    out = patch_metalens_forward(pillar_ls_knots, sharpness)
    out = jax.block_until_ready(out)
    assert out.shape == (H, W_OUT), out.shape

    # correctness check against a pure-JAX float32 reference of the full
    # synthetic forward (scatter assembly + bilinear resize + max-|.| norm)
    xr, xi = assemble_total_response_reference(pillar_ls_knots, sharpness)
    wt = jnp.asarray(_WT_NP)
    yr_ref = xr @ wt
    yi_ref = xi @ wt
    m = jnp.max(jnp.sqrt(yr_ref ** 2 + yi_ref ** 2))
    ref_r = yr_ref / m
    ref_i = yi_ref / m
    np.testing.assert_allclose(np.asarray(out.real), np.asarray(ref_r), atol=2e-2)
    np.testing.assert_allclose(np.asarray(out.imag), np.asarray(ref_i), atol=2e-2)

    print("KERNEL_OK")
</pallas_src>

<mosaic_0001>
module attributes {stable_mosaic.version = 11 : i64} {
  func.func @fused_kernel(%arg0: memref<256x64xbf16, #tpu.memory_space<vmem>>, %arg1: memref<64x512xbf16, #tpu.memory_space<vmem>>, %arg2: memref<256x256xf32, #tpu.memory_space<vmem>>, %arg3: memref<256x256xf32, #tpu.memory_space<vmem>>) attributes {dimension_semantics = [], scalar_prefetch = 0 : i64, scratch_operands = 0 : i64, tpu.core_type = #tpu.core_type<tc>} {
    %c0 = arith.constant 0 : index
    %c0_0 = arith.constant 0 : index
    %0 = vector.load %arg0[%c0, %c0_0] : memref<256x64xbf16, #tpu.memory_space<vmem>>, vector<256x64xbf16>
    %c0_1 = arith.constant 0 : index
    %c0_2 = arith.constant 0 : index
    %1 = vector.load %arg1[%c0_1, %c0_2] : memref<64x512xbf16, #tpu.memory_space<vmem>>, vector<64x512xbf16>
    %cst = arith.constant dense<0.000000e+00> : vector<256x512xf32>
    %2 = tpu.matmul %0, %1, %cst {dimension_numbers = #tpu.dot_dimension_numbers<[1], [0], [0], [1], [0, 0, 1, 1], [], []>} : vector<256x64xbf16>, vector<64x512xbf16>, vector<256x512xf32> -> vector<256x512xf32>
    %3 = vector.extract_strided_slice %2 {offsets = [0, 0], sizes = [256, 256], strides = [1, 1]} : vector<256x512xf32> to vector<256x256xf32>
    %4 = vector.extract_strided_slice %2 {offsets = [0, 256], sizes = [256, 256], strides = [1, 1]} : vector<256x512xf32> to vector<256x256xf32>
    %5 = arith.mulf %3, %3 : vector<256x256xf32>
    %6 = arith.mulf %4, %4 : vector<256x256xf32>
    %7 = arith.addf %5, %6 : vector<256x256xf32>
    %8 = vector.shape_cast %7 : vector<256x256xf32> to vector<1x256x256xf32>
    %cst_3 = arith.constant dense<0xFF800000> : vector<1xf32>
    %9 = vector.multi_reduction <maximumf>, %8, %cst_3 [1, 2] : vector<1x256x256xf32> to vector<1xf32>
    %10 = vector.shape_cast %9 : vector<1xf32> to vector<1x1x1xf32>
    %11 = vector.extract %10[0, 0, 0] : f32 from vector<1x1x1xf32>
    %cst_4 = arith.constant 1.000000e-30 : f32
    %12 = arith.maximumf %11, %cst_4 : f32
    %13 = math.rsqrt %12 : f32
    %14 = vector.broadcast %13 : f32 to vector<256x256xf32>
    %15 = arith.mulf %3, %14 : vector<256x256xf32>
    %c0_5 = arith.constant 0 : index
    %c0_6 = arith.constant 0 : index
    %16 = vector.load %arg2[%c0_5, %c0_6] : memref<256x256xf32, #tpu.memory_space<vmem>>, vector<256x256xf32>
    tpu.vector_store %arg2[%c0_5, %c0_6], %15 {strides = array<i32>} : memref<256x256xf32, #tpu.memory_space<vmem>>, vector<256x256xf32>,
    %17 = vector.broadcast %13 : f32 to vector<256x256xf32>
    %18 = arith.mulf %4, %17 : vector<256x256xf32>
    %c0_7 = arith.constant 0 : index
    %c0_8 = arith.constant 0 : index
    %19 = vector.load %arg3[%c0_7, %c0_8] : memref<256x256xf32, #tpu.memory_space<vmem>>, vector<256x256xf32>
    tpu.vector_store %arg3[%c0_7, %c0_8], %18 {strides = array<i32>} : memref<256x256xf32, #tpu.memory_space<vmem>>, vector<256x256xf32>,
    return
  }
}

</mosaic_0001>

<llo_original>
// kernel: neg.5
$region0: #{neg.5}
  #allocation0 [shape = 's32[1]{0}', space=sflag, size = 0x4, scoped, tag = 'scoped memory for neg.5']
  %s0 = inlined_call_operand.vmem [shape: f32[32], index: 0, kind: input, shape index: {}]
  %s1 = inlined_call_operand.vmem [shape: f32[32], index: 1, kind: output, shape index: {}]
  %v2 = vld [vmem:[%s0] sm:$0x1]
  %3 = xla_tuple %v2
  %4 = xla_tuple %3
  %v5 = vxor.u32 %v2, 2147483648
  %6 = xla_tuple %v5
  %7 = vst [vmem:[%s1] sm:$0x1] %v5

// kernel: custom-call
$region0: #{custom-call}
  %s0 = inlined_call_operand.vmem [shape: f32[256,256], index: 0, kind: input, shape index: {}]
  %s1 = inlined_call_operand.vmem [shape: f32[256,256], index: 1, kind: input, shape index: {}]
  %s2 = inlined_call_operand.hbm [shape: c64[256,256], index: 2, kind: output, shape index: {}]
  %s3 = scalar_lea.hbm %s2, 8192
  $region1: #{custom-call} parent=0
    #allocation0 [shape = 's32[1]{0}', space=sflag, size = 0x4, scoped, tag = 'scoped memory for custom-call']
    %4 = vsyncpa [#allocation0], 0
    %s5 = sshll.u32 %s0, 4
    %s6 = int_to_ptr.vmem [resolvable:$true] %s5
    %8 = dma.vmem_to_hbm [thread:$0]  %s6, 8192, %s2, [#allocation0]
    %9 = dma.done [#allocation0], 8192
    %10 = vsyncpa [#allocation0], 1
  $region2: #{custom-call} parent=0
    #allocation1 [shape = 's32[1]{0}', space=sflag, size = 0x4, scoped, tag = 'scoped memory for custom-call']
    %11 = vsyncpa [#allocation1], 0
    %s12 = sshll.u32 %s1, 4
    %s13 = int_to_ptr.vmem [resolvable:$true] %s12
    %15 = dma.vmem_to_hbm [thread:$0]  %s13, 8192, %s3, [#allocation1]
    %16 = dma.done [#allocation1], 8192
    %17 = vsyncpa [#allocation1], 1

// kernel: _forward_impl.1
$region0: #{_forward_impl.1}
  #allocation0 [shape = 'u32[]', space=smem, size = 0x4, offset = 0x4, fixed_abs, tag = 'smem constant byte address 0x4 - core index']
  #allocation1 [shape = 'u32[144,128]{1,0:T(1,128)}', space=vmem, size = 0x12000, scoped, tag = 'internal scratch']
  %s0 = inlined_call_operand.vmem [shape: bf16[256,64], index: 0, kind: input, shape index: {}]
  %s1 = inlined_call_operand.vmem [shape: bf16[64,512], index: 1, kind: input, shape index: {}]
  %s2 = inlined_call_operand.vmem [shape: f32[256,256], index: 2, kind: output, shape index: {0}]
  %s3 = inlined_call_operand.vmem [shape: f32[256,256], index: 3, kind: output, shape index: {1}]
  %4 = xla_tuple %s2, %s3
  %s5 = sld [smem:[#allocation0]]
  $region26: #{_forward_impl.1} parent=0
    _
  %s7 = ssub.s32 1, %s5
  %s8 = scalar_select 0, %s7, %s5
  // Predicated region
  $region2: #{_forward_impl.1} parent=0 // pred_check
    _
  $region3: #{_forward_impl.1} parent=0 // pred_check_branch
    %10 = sbr.rel (0) target = $region5
  $region4: #{_forward_impl.1} parent=0 // pred_region
    _
  $region5: #{_forward_impl.1} parent=0 // pred_fallthru
    _
  // Predicated region
  $region6: #{_forward_impl.1} parent=0 // pred_check
    _
  $region7: #{_forward_impl.1} parent=0 // pred_check_branch
    %12 = sbr.rel (0) target = $region9
  $region8: #{_forward_impl.1} parent=0 // pred_region
    _
  $region9: #{_forward_impl.1} parent=0 // pred_fallthru
    _
  %v14 = vld [vmem:[%s0] sm:$0xf]
  %v15 = vld [vmem:[%s0 + $0x4] sm:$0xf]
  %v16 = vld [vmem:[%s0 + $0x8] sm:$0xf]
  %v17 = vld [vmem:[%s0 + $0xc] sm:$0xf]
  %v18 = vld [vmem:[%s0 + $0x10] sm:$0xf]
  %v19 = vld [vmem:[%s0 + $0x14] sm:$0xf]
  %v20 = vld [vmem:[%s0 + $0x18] sm:$0xf]
  %v21 = vld [vmem:[%s0 + $0x1c] sm:$0xf]
  %v22 = vld [vmem:[%s0 + $0x20] sm:$0xf]
  %v23 = vld [vmem:[%s0 + $0x24] sm:$0xf]
  %v24 = vld [vmem:[%s0 + $0x28] sm:$0xf]
  %v25 = vld [vmem:[%s0 + $0x2c] sm:$0xf]
  %v26 = vld [vmem:[%s0 + $0x30] sm:$0xf]
  %v27 = vld [vmem:[%s0 + $0x34] sm:$0xf]
  %v28 = vld [vmem:[%s0 + $0x38] sm:$0xf]
  %v29 = vld [vmem:[%s0 + $0x3c] sm:$0xf]
  %v30 = vld [vmem:[%s0 + $0x40] sm:$0xf]
  %v31 = vld [vmem:[%s0 + $0x44] sm:$0xf]
  %v32 = vld [vmem:[%s0 + $0x48] sm:$0xf]
  %v33 = vld [vmem:[%s0 + $0x4c] sm:$0xf]
  %v34 = vld [vmem:[%s0 + $0x50] sm:$0xf]
  %v35 = vld [vmem:[%s0 + $0x54] sm:$0xf]
  %v36 = vld [vmem:[%s0 + $0x58] sm:$0xf]
  %v37 = vld [vmem:[%s0 + $0x5c] sm:$0xf]
  %v38 = vld [vmem:[%s0 + $0x60] sm:$0xf]
  %v39 = vld [vmem:[%s0 + $0x64] sm:$0xf]
  %v40 = vld [vmem:[%s0 + $0x68] sm:$0xf]
  %v41 = vld [vmem:[%s0 + $0x6c] sm:$0xf]
  %v42 = vld [vmem:[%s0 + $0x70] sm:$0xf]
  %v43 = vld [vmem:[%s0 + $0x74] sm:$0xf]
  %v44 = vld [vmem:[%s0 + $0x78] sm:$0xf]
  %v45 = vld [vmem:[%s0 + $0x7c] sm:$0xf]
  %v46 = vld [vmem:[%s1] sm:$0xff]
  %v47 = vld [vmem:[%s1 + $0x8] sm:$0xff]
  %v48 = vld [vmem:[%s1 + $0x10] sm:$0xff]
  %v49 = vld [vmem:[%s1 + $0x18] sm:$0xff]
  %v50 = vld [vmem:[%s1 + $0x20] sm:$0xff]
  %v51 = vld [vmem:[%s1 + $0x28] sm:$0xff]
  %v52 = vld [vmem:[%s1 + $0x30] sm:$0xff]
  %v53 = vld [vmem:[%s1 + $0x38] sm:$0xff]
  %v54 = vld [vmem:[%s1 + $0x40] sm:$0xff]
  %v55 = vld [vmem:[%s1 + $0x48] sm:$0xff]
  %v56 = vld [vmem:[%s1 + $0x50] sm:$0xff]
  %v57 = vld [vmem:[%s1 + $0x58] sm:$0xff]
  %v58 = vld [vmem:[%s1 + $0x60] sm:$0xff]
  %v59 = vld [vmem:[%s1 + $0x68] sm:$0xff]
  %v60 = vld [vmem:[%s1 + $0x70] sm:$0xff]
  %v61 = vld [vmem:[%s1 + $0x78] sm:$0xff]
  %v94 = vunpack.c.l.b16 %v14
  %v95 = vunpack.c.l.b16 %v15
  %v96 = vunpack.c.l.b16 %v16
  %v97 = vunpack.c.l.b16 %v17
  %v98 = vunpack.c.l.b16 %v18
  %v99 = vunpack.c.l.b16 %v19
  %v100 = vunpack.c.l.b16 %v20
  %v101 = vunpack.c.l.b16 %v21
  %v102 = vunpack.c.l.b16 %v22
  %v103 = vunpack.c.l.b16 %v23
  %v104 = vunpack.c.l.b16 %v24
  %v105 = vunpack.c.l.b16 %v25
  %v106 = vunpack.c.l.b16 %v26
  %v107 = vunpack.c.l.b16 %v27
  %v108 = vunpack.c.l.b16 %v28
  %v109 = vunpack.c.l.b16 %v29
  %v110 = vunpack.c.l.b16 %v30
  %v111 = vunpack.c.l.b16 %v31
  %v112 = vunpack.c.l.b16 %v32
  %v113 = vunpack.c.l.b16 %v33
  %v114 = vunpack.c.l.b16 %v34
  %v115 = vunpack.c.l.b16 %v35
  %v116 = vunpack.c.l.b16 %v36
  %v117 = vunpack.c.l.b16 %v37
  %v118 = vunpack.c.l.b16 %v38
  %v119 = vunpack.c.l.b16 %v39
  %v120 = vunpack.c.l.b16 %v40
  %v121 = vunpack.c.l.b16 %v41
  %v122 = vunpack.c.l.b16 %v42
  %v123 = vunpack.c.l.b16 %v43
  %v124 = vunpack.c.l.b16 %v44
  %v125 = vunpack.c.l.b16 %v45
  %v126 = vpack.c.b16 %v95, %v94
  %v127 = vpack.c.b16 %v97, %v96
  %v128 = vpack.c.b16 %v99, %v98
  %v129 = vpack.c.b16 %v101, %v100
  %v130 = vpack.c.b16 %v103, %v102
  %v131 = vpack.c.b16 %v105, %v104
  %v132 = vpack.c.b16 %v107, %v106
  %v133 = vpack.c.b16 %v109, %v108
  %v134 = vpack.c.b16 %v111, %v110
  %v135 = vpack.c.b16 %v113, %v112
  %v136 = vpack.c.b16 %v115, %v114
  %v137 = vpack.c.b16 %v117, %v116
  %v138 = vpack.c.b16 %v119, %v118
  %v139 = vpack.c.b16 %v121, %v120
  %v140 = vpack.c.b16 %v123, %v122
  %v141 = vpack.c.b16 %v125, %v124
  %v158 = vunpack.c.l.b16 %v46
  %v159 = vunpack.c.h.b16 %v46
  %v160 = vunpack.c.l.b16 %v47
  %v161 = vunpack.c.h.b16 %v47
  %v162 = vunpack.c.l.b16 %v48
  %v163 = vunpack.c.h.b16 %v48
  %v164 = vunpack.c.l.b16 %v49
  %v165 = vunpack.c.h.b16 %v49
  %v166 = vunpack.c.l.b16 %v50
  %v167 = vunpack.c.h.b16 %v50
  %v168 = vunpack.c.l.b16 %v51
  %v169 = vunpack.c.h.b16 %v51
  %v170 = vunpack.c.l.b16 %v52
  %v171 = vunpack.c.h.b16 %v52
  %v172 = vunpack.c.l.b16 %v53
  %v173 = vunpack.c.h.b16 %v53
  %v174 = vunpack.c.l.b16 %v54
  %v175 = vunpack.c.h.b16 %v54
  %v176 = vunpack.c.l.b16 %v55
  %v177 = vunpack.c.h.b16 %v55
  %v178 = vunpack.c.l.b16 %v56
  %v179 = vunpack.c.h.b16 %v56
  %v180 = vunpack.c.l.b16 %v57
  %v181 = vunpack.c.h.b16 %v57
  %v182 = vunpack.c.l.b16 %v58
  %v183 = vunpack.c.h.b16 %v58
  %v184 = vunpack.c.l.b16 %v59
  %v185 = vunpack.c.h.b16 %v59
  %v186 = vunpack.c.l.b16 %v60
  %v187 = vunpack.c.h.b16 %v60
  %v188 = vunpack.c.l.b16 %v61
  %v189 = vunpack.c.h.b16 %v61
  %v190 = vpack.c.b16 %v162, %v158
  %v191 = vpack.c.b16 %v163, %v159
  %v192 = vpack.c.b16 %v164, %v160
  %v193 = vpack.c.b16 %v165, %v161
  %v194 = vpack.c.b16 %v170, %v166
  %v195 = vpack.c.b16 %v171, %v167
  %v196 = vpack.c.b16 %v172, %v168
  %v197 = vpack.c.b16 %v173, %v169
  %v198 = vpack.c.b16 %v178, %v174
  %v199 = vpack.c.b16 %v179, %v175
  %v200 = vpack.c.b16 %v180, %v176
  %v201 = vpack.c.b16 %v181, %v177
  %v202 = vpack.c.b16 %v186, %v182
  %v203 = vpack.c.b16 %v187, %v183
  %v204 = vpack.c.b16 %v188, %v184
  %v205 = vpack.c.b16 %v189, %v185
  %vm222 = vcmask 523264
  %v224 = vsel %vm222, %v126, 0
  %v227 = vsel %vm222, %v127, 0
  %v230 = vsel %vm222, %v128, 0
  %v233 = vsel %vm222, %v129, 0
  %v236 = vsel %vm222, %v130, 0
  %v239 = vsel %vm222, %v131, 0
  %v242 = vsel %vm222, %v132, 0
  %v245 = vsel %vm222, %v133, 0
  %v248 = vsel %vm222, %v134, 0
  %v251 = vsel %vm222, %v135, 0
  %v254 = vsel %vm222, %v136, 0
  %v257 = vsel %vm222, %v137, 0
  %v260 = vsel %vm222, %v138, 0
  %v263 = vsel %vm222, %v139, 0
  %v266 = vsel %vm222, %v140, 0
  %v269 = vsel %vm222, %v141, 0
  %271 = vmatprep.subr.bf16.mxu0 %v191
  %272 = vmatpush1.bf16.msra.mxu0 %v190
  %273 = vmatprep.subr.bf16.mxu0 %v195
  %274 = vmatpush1.bf16.msra.mxu0 %v194
  %275 = vmatprep.subr.bf16.mxu0 %v199
  %276 = vmatpush1.bf16.msra.mxu0 %v198
  %277 = vmatprep.subr.bf16.mxu0 %v203
  %278 = vmatpush1.bf16.msra.mxu0 %v202
  %279 = vmatprep.subr.bf16.mxu0 0
  %280 = vmatpush1.bf16.msra.mxu0 0
  %281 = vmatprep.subr.bf16.mxu0 0
  %282 = vmatpush1.bf16.msra.mxu0 0
  %283 = vmatprep.subr.bf16.mxu0 0
  %284 = vmatpush1.bf16.msra.mxu0 0
  %285 = vmatprep.subr.bf16.mxu0 0
  %286 = vmatpush1.bf16.msra.mxu0 0
  %287 = vmatprep.subr.bf16.mxu0 0
  %288 = vmatpush1.bf16.msra.mxu0 0
  %289 = vmatprep.subr.bf16.mxu0 0
  %290 = vmatpush1.bf16.msra.mxu0 0
  %291 = vmatprep.subr.bf16.mxu0 0
  %292 = vmatpush1.bf16.msra.mxu0 0
  %293 = vmatprep.subr.bf16.mxu0 0
  %294 = vmatpush1.bf16.msra.mxu0 0
  %295 = vmatprep.subr.bf16.mxu0 0
  %296 = vmatpush1.bf16.msra.mxu0 0
  %297 = vmatprep.subr.bf16.mxu0 0
  %298 = vmatpush1.bf16.msra.mxu0 0
  %299 = vmatprep.subr.bf16.mxu0 0
  %300 = vmatpush1.bf16.msra.mxu0 0
  %301 = vmatprep.subr.bf16.mxu0 0
  %302 = vmatpush1.bf16.msra.mxu0 0
  %303 = vmatprep.mubr.bf16.mxu0 0
  %304 = vmatmul.mubr.bf16.gmra.mrb[0].mxu0 %v224
  %v305 = vpop.f32.mrb[0].mxu0
  %v306 = vadd.f32 0.0, %v305
  %v307 = vpop.f32.mrb[0].mxu0
  %v308 = vadd.f32 0.0, %v307
  %v309 = vpop.f32.mrb[0].mxu0
  %v310 = vadd.f32 0.0, %v309
  %v311 = vpop.f32.mrb[0].mxu0
  %v312 = vadd.f32 0.0, %v311
  %313 = vmatprep.mubr.bf16.mxu0 0
  %314 = vmatmul.mubr.bf16.gmra.mrb[0].mxu0 %v227
  %v315 = vpop.f32.mrb[0].mxu0
  %v316 = vadd.f32 0.0, %v315
  %v317 = vpop.f32.mrb[0].mxu0
  %v318 = vadd.f32 0.0, %v317
  %v319 = vpop.f32.mrb[0].mxu0
  %v320 = vadd.f32 0.0, %v319
  %v321 = vpop.f32.mrb[0].mxu0
  %v322 = vadd.f32 0.0, %v321
  %323 = vmatprep.mubr.bf16.mxu0 0
  %324 = vmatmul.mubr.bf16.gmra.mrb[0].mxu0 %v230
  %v325 = vpop.f32.mrb[0].mxu0
  %v326 = vadd.f32 0.0, %v325
  %v327 = vpop.f32.mrb[0].mxu0
  %v328 = vadd.f32 0.0, %v327
  %v329 = vpop.f32.mrb[0].mxu0
  %v330 = vadd.f32 0.0, %v329
  %v331 = vpop.f32.mrb[0].mxu0
  %v332 = vadd.f32 0.0, %v331
  %333 = vmatprep.mubr.bf16.mxu0 0
  %334 = vmatmul.mubr.bf16.gmra.mrb[0].mxu0 %v233
  %v335 = vpop.f32.mrb[0].mxu0
  %v336 = vadd.f32 0.0, %v335
  %v337 = vpop.f32.mrb[0].mxu0
  %v338 = vadd.f32 0.0, %v337
  %v339 = vpop.f32.mrb[0].mxu0
  %v340 = vadd.f32 0.0, %v339
  %v341 = vpop.f32.mrb[0].mxu0
  %v342 = vadd.f32 0.0, %v341
  %343 = vmatprep.mubr.bf16.mxu0 0
  %344 = vmatmul.mubr.bf16.gmra.mrb[0].mxu0 %v236
  %v345 = vpop.f32.mrb[0].mxu0
  %v346 = vadd.f32 0.0, %v345
  %v347 = vpop.f32.mrb[0].mxu0
  %v348 = vadd.f32 0.0, %v347
  %v349 = vpop.f32.mrb[0].mxu0
  %v350 = vadd.f32 0.0, %v349
  %v351 = vpop.f32.mrb[0].mxu0
  %v352 = vadd.f32 0.0, %v351
  %353 = vmatprep.mubr.bf16.mxu0 0
  %354 = vmatmul.mubr.bf16.gmra.mrb[0].mxu0 %v239
  %v355 = vpop.f32.mrb[0].mxu0
  %v356 = vadd.f32 0.0, %v355
  %v357 = vpop.f32.mrb[0].mxu0
  %v358 = vadd.f32 0.0, %v357
  %v359 = vpop.f32.mrb[0].mxu0
  %v360 = vadd.f32 0.0, %v359
  %v361 = vpop.f32.mrb[0].mxu0
  %v362 = vadd.f32 0.0, %v361
  %363 = vmatprep.mubr.bf16.mxu0 0
  %364 = vmatmul.mubr.bf16.gmra.mrb[0].mxu0 %v242
  %v365 = vpop.f32.mrb[0].mxu0
  %v366 = vadd.f32 0.0, %v365
  %v367 = vpop.f32.mrb[0].mxu0
  %v368 = vadd.f32 0.0, %v367
  %v369 = vpop.f32.mrb[0].mxu0
  %v370 = vadd.f32 0.0, %v369
  %v371 = vpop.f32.mrb[0].mxu0
  %v372 = vadd.f32 0.0, %v371
  %373 = vmatprep.mubr.bf16.mxu0 0
  %374 = vmatmul.mubr.bf16.gmra.mrb[0].mxu0 %v245
  %v375 = vpop.f32.mrb[0].mxu0
  %v376 = vadd.f32 0.0, %v375
  %v377 = vpop.f32.mrb[0].mxu0
  %v378 = vadd.f32 0.0, %v377
  %v379 = vpop.f32.mrb[0].mxu0
  %v380 = vadd.f32 0.0, %v379
  %v381 = vpop.f32.mrb[0].mxu0
  %v382 = vadd.f32 0.0, %v381
  %383 = vmatprep.mubr.bf16.mxu0 0
  %384 = vmatmul.mubr.bf16.gmra.mrb[0].mxu0 %v248
  %v385 = vpop.f32.mrb[0].mxu0
  %v386 = vadd.f32 0.0, %v385
  %v387 = vpop.f32.mrb[0].mxu0
  %v388 = vadd.f32 0.0, %v387
  %v389 = vpop.f32.mrb[0].mxu0
  %v390 = vadd.f32 0.0, %v389
  %v391 = vpop.f32.mrb[0].mxu0
  %v392 = vadd.f32 0.0, %v391
  %393 = vmatprep.mubr.bf16.mxu0 0
  %394 = vmatmul.mubr.bf16.gmra.mrb[0].mxu0 %v251
  %v395 = vpop.f32.mrb[0].mxu0
  %v396 = vadd.f32 0.0, %v395
  %v397 = vpop.f32.mrb[0].mxu0
  %v398 = vadd.f32 0.0, %v397
  %v399 = vpop.f32.mrb[0].mxu0
  %v400 = vadd.f32 0.0, %v399
  %v401 = vpop.f32.mrb[0].mxu0
  %v402 = vadd.f32 0.0, %v401
  %403 = vmatprep.mubr.bf16.mxu0 0
  %404 = vmatmul.mubr.bf16.gmra.mrb[0].mxu0 %v254
  %v405 = vpop.f32.mrb[0].mxu0
  %v406 = vadd.f32 0.0, %v405
  %v407 = vpop.f32.mrb[0].mxu0
  %v408 = vadd.f32 0.0, %v407
  %v409 = vpop.f32.mrb[0].mxu0
  %v410 = vadd.f32 0.0, %v409
  %v411 = vpop.f32.mrb[0].mxu0
  %v412 = vadd.f32 0.0, %v411
  %413 = vmatprep.mubr.bf16.mxu0 0
  %414 = vmatmul.mubr.bf16.gmra.mrb[0].mxu0 %v257
  %v415 = vpop.f32.mrb[0].mxu0
  %v416 = vadd.f32 0.0, %v415
  %v417 = vpop.f32.mrb[0].mxu0
  %v418 = vadd.f32 0.0, %v417
  %v419 = vpop.f32.mrb[0].mxu0
  %v420 = vadd.f32 0.0, %v419
  %v421 = vpop.f32.mrb[0].mxu0
  %v422 = vadd.f32 0.0, %v421
  %423 = vmatprep.mubr.bf16.mxu0 0
  %424 = vmatmul.mubr.bf16.gmra.mrb[0].mxu0 %v260
  %v425 = vpop.f32.mrb[0].mxu0
  %v426 = vadd.f32 0.0, %v425
  %v427 = vpop.f32.mrb[0].mxu0
  %v428 = vadd.f32 0.0, %v427
  %v429 = vpop.f32.mrb[0].mxu0
  %v430 = vadd.f32 0.0, %v429
  %v431 = vpop.f32.mrb[0].mxu0
  %v432 = vadd.f32 0.0, %v431
  %433 = vmatprep.mubr.bf16.mxu0 0
  %434 = vmatmul.mubr.bf16.gmra.mrb[0].mxu0 %v263
  %v435 = vpop.f32.mrb[0].mxu0
  %v436 = vadd.f32 0.0, %v435
  %v437 = vpop.f32.mrb[0].mxu0
  %v438 = vadd.f32 0.0, %v437
  %v439 = vpop.f32.mrb[0].mxu0
  %v440 = vadd.f32 0.0, %v439
  %v441 = vpop.f32.mrb[0].mxu0
  %v442 = vadd.f32 0.0, %v441
  %443 = vmatprep.mubr.bf16.mxu0 0
  %444 = vmatmul.mubr.bf16.gmra.mrb[0].mxu0 %v266
  %v445 = vpop.f32.mrb[0].mxu0
  %v446 = vadd.f32 0.0, %v445
  %v447 = vpop.f32.mrb[0].mxu0
  %v448 = vadd.f32 0.0, %v447
  %v449 = vpop.f32.mrb[0].mxu0
  %v450 = vadd.f32 0.0, %v449
  %v451 = vpop.f32.mrb[0].mxu0
  %v452 = vadd.f32 0.0, %v451
  %453 = vmatprep.mubr.bf16.mxu0 0
  %454 = vmatmul.mubr.bf16.gmra.mrb[0].mxu0 %v269
  %v455 = vpop.f32.mrb[0].mxu0
  %v456 = vadd.f32 0.0, %v455
  %v457 = vpop.f32.mrb[0].mxu0
  %v458 = vadd.f32 0.0, %v457
  %v459 = vpop.f32.mrb[0].mxu0
  %v460 = vadd.f32 0.0, %v459
  %v461 = vpop.f32.mrb[0].mxu0
  %v462 = vadd.f32 0.0, %v461
  %463 = vdwg.mxu0
  %464 = vmatprep.subr.bf16.mxu0 %v193
  %465 = vmatpush1.bf16.msra.mxu0 %v192
  %466 = vmatprep.subr.bf16.mxu0 %v197
  %467 = vmatpush1.bf16.msra.mxu0 %v196
  %468 = vmatprep.subr.bf16.mxu0 %v201
  %469 = vmatpush1.bf16.msra.mxu0 %v200
  %470 = vmatprep.subr.bf16.mxu0 %v205
  %471 = vmatpush1.bf16.msra.mxu0 %v204
  %472 = vmatprep.subr.bf16.mxu0 0
  %473 = vmatpush1.bf16.msra.mxu0 0
  %474 = vmatprep.subr.bf16.mxu0 0
  %475 = vmatpush1.bf16.msra.mxu0 0
  %476 = vmatprep.subr.bf16.mxu0 0
  %477 = vmatpush1.bf16.msra.mxu0 0
  %478 = vmatprep.subr.bf16.mxu0 0
  %479 = vmatpush1.bf16.msra.mxu0 0
  %480 = vmatprep.subr.bf16.mxu0 0
  %481 = vmatpush1.bf16.msra.mxu0 0
  %482 = vmatprep.subr.bf16.mxu0 0
  %483 = vmatpush1.bf16.msra.mxu0 0
  %484 = vmatprep.subr.bf16.mxu0 0
  %485 = vmatpush1.bf16.msra.mxu0 0
  %486 = vmatprep.subr.bf16.mxu0 0
  %487 = vmatpush1.bf16.msra.mxu0 0
  %488 = vmatprep.subr.bf16.mxu0 0
  %489 = vmatpush1.bf16.msra.mxu0 0
  %490 = vmatprep.subr.bf16.mxu0 0
  %491 = vmatpush1.bf16.msra.mxu0 0
  %492 = vmatprep.subr.bf16.mxu0 0
  %493 = vmatpush1.bf16.msra.mxu0 0
  %494 = vmatprep.subr.bf16.mxu0 0
  %495 = vmatpush1.bf16.msra.mxu0 0
  %496 = vmatprep.mubr.bf16.mxu0 0
  %497 = vmatmul.mubr.bf16.gmra.mrb[0].mxu0 %v224
  %v498 = vpop.f32.mrb[0].mxu0
  %v499 = vadd.f32 0.0, %v498
  %v500 = vpop.f32.mrb[0].mxu0
  %v501 = vadd.f32 0.0, %v500
  %v502 = vpop.f32.mrb[0].mxu0
  %v503 = vadd.f32 0.0, %v502
  %v504 = vpop.f32.mrb[0].mxu0
  %v505 = vadd.f32 0.0, %v504
  %506 = vmatprep.mubr.bf16.mxu0 0
  %507 = vmatmul.mubr.bf16.gmra.mrb[0].mxu0 %v227
  %v508 = vpop.f32.mrb[0].mxu0
  %v509 = vadd.f32 0.0, %v508
  %v510 = vpop.f32.mrb[0].mxu0
  %v511 = vadd.f32 0.0, %v510
  %v512 = vpop.f32.mrb[0].mxu0
  %v513 = vadd.f32 0.0, %v512
  %v514 = vpop.f32.mrb[0].mxu0
  %v515 = vadd.f32 0.0, %v514
  %516 = vmatprep.mubr.bf16.mxu0 0
  %517 = vmatmul.mubr.bf16.gmra.mrb[0].mxu0 %v230
  %v518 = vpop.f32.mrb[0].mxu0
  %v519 = vadd.f32 0.0, %v518
  %v520 = vpop.f32.mrb[0].mxu0
  %v521 = vadd.f32 0.0, %v520
  %v522 = vpop.f32.mrb[0].mxu0
  %v523 = vadd.f32 0.0, %v522
  %v524 = vpop.f32.mrb[0].mxu0
  %v525 = vadd.f32 0.0, %v524
  %526 = vmatprep.mubr.bf16.mxu0 0
  %527 = vmatmul.mubr.bf16.gmra.mrb[0].mxu0 %v233
  %v528 = vpop.f32.mrb[0].mxu0
  %v529 = vadd.f32 0.0, %v528
  %v530 = vpop.f32.mrb[0].mxu0
  %v531 = vadd.f32 0.0, %v530
  %v532 = vpop.f32.mrb[0].mxu0
  %v533 = vadd.f32 0.0, %v532
  %v534 = vpop.f32.mrb[0].mxu0
  %v535 = vadd.f32 0.0, %v534
  %536 = vmatprep.mubr.bf16.mxu0 0
  %537 = vmatmul.mubr.bf16.gmra.mrb[0].mxu0 %v236
  %v538 = vpop.f32.mrb[0].mxu0
  %v539 = vadd.f32 0.0, %v538
  %v540 = vpop.f32.mrb[0].mxu0
  %v541 = vadd.f32 0.0, %v540
  %v542 = vpop.f32.mrb[0].mxu0
  %v543 = vadd.f32 0.0, %v542
  %v544 = vpop.f32.mrb[0].mxu0
  %v545 = vadd.f32 0.0, %v544
  %546 = vmatprep.mubr.bf16.mxu0 0
  %547 = vmatmul.mubr.bf16.gmra.mrb[0].mxu0 %v239
  %v548 = vpop.f32.mrb[0].mxu0
  %v549 = vadd.f32 0.0, %v548
  %v550 = vpop.f32.mrb[0].mxu0
  %v551 = vadd.f32 0.0, %v550
  %v552 = vpop.f32.mrb[0].mxu0
  %v553 = vadd.f32 0.0, %v552
  %v554 = vpop.f32.mrb[0].mxu0
  %v555 = vadd.f32 0.0, %v554
  %556 = vmatprep.mubr.bf16.mxu0 0
  %557 = vmatmul.mubr.bf16.gmra.mrb[0].mxu0 %v242
  %v558 = vpop.f32.mrb[0].mxu0
  %v559 = vadd.f32 0.0, %v558
  %v560 = vpop.f32.mrb[0].mxu0
  %v561 = vadd.f32 0.0, %v560
  %v562 = vpop.f32.mrb[0].mxu0
  %v563 = vadd.f32 0.0, %v562
  %v564 = vpop.f32.mrb[0].mxu0
  %v565 = vadd.f32 0.0, %v564
  %566 = vmatprep.mubr.bf16.mxu0 0
  %567 = vmatmul.mubr.bf16.gmra.mrb[0].mxu0 %v245
  %v568 = vpop.f32.mrb[0].mxu0
  %v569 = vadd.f32 0.0, %v568
  %v570 = vpop.f32.mrb[0].mxu0
  %v571 = vadd.f32 0.0, %v570
  %v572 = vpop.f32.mrb[0].mxu0
  %v573 = vadd.f32 0.0, %v572
  %v574 = vpop.f32.mrb[0].mxu0
  %v575 = vadd.f32 0.0, %v574
  %576 = vmatprep.mubr.bf16.mxu0 0
  %577 = vmatmul.mubr.bf16.gmra.mrb[0].mxu0 %v248
  %v578 = vpop.f32.mrb[0].mxu0
  %v579 = vadd.f32 0.0, %v578
  %v580 = vpop.f32.mrb[0].mxu0
  %v581 = vadd.f32 0.0, %v580
  %v582 = vpop.f32.mrb[0].mxu0
  %v583 = vadd.f32 0.0, %v582
  %v584 = vpop.f32.mrb[0].mxu0
  %v585 = vadd.f32 0.0, %v584
  %586 = vmatprep.mubr.bf16.mxu0 0
  %587 = vmatmul.mubr.bf16.gmra.mrb[0].mxu0 %v251
  %v588 = vpop.f32.mrb[0].mxu0
  %v589 = vadd.f32 0.0, %v588
  %v590 = vpop.f32.mrb[0].mxu0
  %v591 = vadd.f32 0.0, %v590
  %v592 = vpop.f32.mrb[0].mxu0
  %v593 = vadd.f32 0.0, %v592
  %v594 = vpop.f32.mrb[0].mxu0
  %v595 = vadd.f32 0.0, %v594
  %596 = vmatprep.mubr.bf16.mxu0 0
  %597 = vmatmul.mubr.bf16.gmra.mrb[0].mxu0 %v254
  %v598 = vpop.f32.mrb[0].mxu0
  %v599 = vadd.f32 0.0, %v598
  %v600 = vpop.f32.mrb[0].mxu0
  %v601 = vadd.f32 0.0, %v600
  %v602 = vpop.f32.mrb[0].mxu0
  %v603 = vadd.f32 0.0, %v602
  %v604 = vpop.f32.mrb[0].mxu0
  %v605 = vadd.f32 0.0, %v604
  %606 = vmatprep.mubr.bf16.mxu0 0
  %607 = vmatmul.mubr.bf16.gmra.mrb[0].mxu0 %v257
  %v608 = vpop.f32.mrb[0].mxu0
  %v609 = vadd.f32 0.0, %v608
  %v610 = vpop.f32.mrb[0].mxu0
  %v611 = vadd.f32 0.0, %v610
  %v612 = vpop.f32.mrb[0].mxu0
  %v613 = vadd.f32 0.0, %v612
  %v614 = vpop.f32.mrb[0].mxu0
  %v615 = vadd.f32 0.0, %v614
  %616 = vmatprep.mubr.bf16.mxu0 0
  %617 = vmatmul.mubr.bf16.gmra.mrb[0].mxu0 %v260
  %v618 = vpop.f32.mrb[0].mxu0
  %v619 = vadd.f32 0.0, %v618
  %v620 = vpop.f32.mrb[0].mxu0
  %v621 = vadd.f32 0.0, %v620
  %v622 = vpop.f32.mrb[0].mxu0
  %v623 = vadd.f32 0.0, %v622
  %v624 = vpop.f32.mrb[0].mxu0
  %v625 = vadd.f32 0.0, %v624
  %626 = vmatprep.mubr.bf16.mxu0 0
  %627 = vmatmul.mubr.bf16.gmra.mrb[0].mxu0 %v263
  %v628 = vpop.f32.mrb[0].mxu0
  %v629 = vadd.f32 0.0, %v628
  %v630 = vpop.f32.mrb[0].mxu0
  %v631 = vadd.f32 0.0, %v630
  %v632 = vpop.f32.mrb[0].mxu0
  %v633 = vadd.f32 0.0, %v632
  %v634 = vpop.f32.mrb[0].mxu0
  %v635 = vadd.f32 0.0, %v634
  %636 = vmatprep.mubr.bf16.mxu0 0
  %637 = vmatmul.mubr.bf16.gmra.mrb[0].mxu0 %v266
  %v638 = vpop.f32.mrb[0].mxu0
  %v639 = vadd.f32 0.0, %v638
  %v640 = vpop.f32.mrb[0].mxu0
  %v641 = vadd.f32 0.0, %v640
  %v642 = vpop.f32.mrb[0].mxu0
  %v643 = vadd.f32 0.0, %v642
  %v644 = vpop.f32.mrb[0].mxu0
  %v645 = vadd.f32 0.0, %v644
  %646 = vmatprep.mubr.bf16.mxu0 0
  %647 = vmatmul.mubr.bf16.gmra.mrb[0].mxu0 %v269
  %v648 = vpop.f32.mrb[0].mxu0
  %v649 = vadd.f32 0.0, %v648
  %v650 = vpop.f32.mrb[0].mxu0
  %v651 = vadd.f32 0.0, %v650
  %v652 = vpop.f32.mrb[0].mxu0
  %v653 = vadd.f32 0.0, %v652
  %v654 = vpop.f32.mrb[0].mxu0
  %v655 = vadd.f32 0.0, %v654
  %656 = vdwg.mxu0
  %v657 = vmul.f32 %v306, %v306
  %v658 = vmul.f32 %v308, %v308
  %v659 = vmul.f32 %v310, %v310
  %v660 = vmul.f32 %v312, %v312
  %v661 = vmul.f32 %v316, %v316
  %v662 = vmul.f32 %v318, %v318
  %v663 = vmul.f32 %v320, %v320
  %v664 = vmul.f32 %v322, %v322
  %v665 = vmul.f32 %v326, %v326
  %v666 = vmul.f32 %v328, %v328
  %v667 = vmul.f32 %v330, %v330
  %v668 = vmul.f32 %v332, %v332
  %v669 = vmul.f32 %v336, %v336
  %v670 = vmul.f32 %v338, %v338
  %v671 = vmul.f32 %v340, %v340
  %v672 = vmul.f32 %v342, %v342
  %v673 = vmul.f32 %v346, %v346
  %v674 = vmul.f32 %v348, %v348
  %v675 = vmul.f32 %v350, %v350
  %v676 = vmul.f32 %v352, %v352
  %v677 = vmul.f32 %v356, %v356
  %v678 = vmul.f32 %v358, %v358
  %v679 = vmul.f32 %v360, %v360
  %v680 = vmul.f32 %v362, %v362
  %v681 = vmul.f32 %v366, %v366
  %v682 = vmul.f32 %v368, %v368
  %v683 = vmul.f32 %v370, %v370
  %v684 = vmul.f32 %v372, %v372
  %v685 = vmul.f32 %v376, %v376
  %v686 = vmul.f32 %v378, %v378
  %v687 = vmul.f32 %v380, %v380
  %v688 = vmul.f32 %v382, %v382
  %v689 = vmul.f32 %v386, %v386
  %v690 = vmul.f32 %v388, %v388
  %v691 = vmul.f32 %v390, %v390
  %v692 = vmul.f32 %v392, %v392
  %v693 = vmul.f32 %v396, %v396
  %v694 = vmul.f32 %v398, %v398
  %v695 = vmul.f32 %v400, %v400
  %v696 = vmul.f32 %v402, %v402
  %v697 = vmul.f32 %v406, %v406
  %v698 = vmul.f32 %v408, %v408
  %v699 = vmul.f32 %v410, %v410
  %v700 = vmul.f32 %v412, %v412
  %v701 = vmul.f32 %v416, %v416
  %v702 = vmul.f32 %v418, %v418
  %v703 = vmul.f32 %v420, %v420
  %v704 = vmul.f32 %v422, %v422
  %v705 = vmul.f32 %v426, %v426
  %v706 = vmul.f32 %v428, %v428
  %v707 = vmul.f32 %v430, %v430
  %v708 = vmul.f32 %v432, %v432
  %v709 = vmul.f32 %v436, %v436
  %v710 = vmul.f32 %v438, %v438
  %v711 = vmul.f32 %v440, %v440
  %v712 = vmul.f32 %v442, %v442
  %v713 = vmul.f32 %v446, %v446
  %v714 = vmul.f32 %v448, %v448
  %v715 = vmul.f32 %v450, %v450
  %v716 = vmul.f32 %v452, %v452
  %v717 = vmul.f32 %v456, %v456
  %v718 = vmul.f32 %v458, %v458
  %v719 = vmul.f32 %v460, %v460
  %v720 = vmul.f32 %v462, %v462
  %v721 = vmul.f32 %v499, %v499
  %v722 = vmul.f32 %v501, %v501
  %v723 = vmul.f32 %v503, %v503
  %v724 = vmul.f32 %v505, %v505
  %v725 = vmul.f32 %v509, %v509
  %v726 = vmul.f32 %v511, %v511
  %v727 = vmul.f32 %v513, %v513
  %v728 = vmul.f32 %v515, %v515
  %v729 = vmul.f32 %v519, %v519
  %v730 = vmul.f32 %v521, %v521
  %v731 = vmul.f32 %v523, %v523
  %v732 = vmul.f32 %v525, %v525
  %v733 = vmul.f32 %v529, %v529
  %v734 = vmul.f32 %v531, %v531
  %v735 = vmul.f32 %v533, %v533
  %v736 = vmul.f32 %v535, %v535
  %v737 = vmul.f32 %v539, %v539
  %v738 = vmul.f32 %v541, %v541
  %v739 = vmul.f32 %v543, %v543
  %v740 = vmul.f32 %v545, %v545
  %v741 = vmul.f32 %v549, %v549
  %v742 = vmul.f32 %v551, %v551
  %v743 = vmul.f32 %v553, %v553
  %v744 = vmul.f32 %v555, %v555
  %v745 = vmul.f32 %v559, %v559
  %v746 = vmul.f32 %v561, %v561
  %v747 = vmul.f32 %v563, %v563
  %v748 = vmul.f32 %v565, %v565
  %v749 = vmul.f32 %v569, %v569
  %v750 = vmul.f32 %v571, %v571
  %v751 = vmul.f32 %v573, %v573
  %v752 = vmul.f32 %v575, %v575
  %v753 = vmul.f32 %v579, %v579
  %v754 = vmul.f32 %v581, %v581
  %v755 = vmul.f32 %v583, %v583
  %v756 = vmul.f32 %v585, %v585
  %v757 = vmul.f32 %v589, %v589
  %v758 = vmul.f32 %v591, %v591
  %v759 = vmul.f32 %v593, %v593
  %v760 = vmul.f32 %v595, %v595
  %v761 = vmul.f32 %v599, %v599
  %v762 = vmul.f32 %v601, %v601
  %v763 = vmul.f32 %v603, %v603
  %v764 = vmul.f32 %v605, %v605
  %v765 = vmul.f32 %v609, %v609
  %v766 = vmul.f32 %v611, %v611
  %v767 = vmul.f32 %v613, %v613
  %v768 = vmul.f32 %v615, %v615
  %v769 = vmul.f32 %v619, %v619
  %v770 = vmul.f32 %v621, %v621
  %v771 = vmul.f32 %v623, %v623
  %v772 = vmul.f32 %v625, %v625
  %v773 = vmul.f32 %v629, %v629
  %v774 = vmul.f32 %v631, %v631
  %v775 = vmul.f32 %v633, %v633
  %v776 = vmul.f32 %v635, %v635
  %v777 = vmul.f32 %v639, %v639
  %v778 = vmul.f32 %v641, %v641
  %v779 = vmul.f32 %v643, %v643
  %v780 = vmul.f32 %v645, %v645
  %v781 = vmul.f32 %v649, %v649
  %v782 = vmul.f32 %v651, %v651
  %v783 = vmul.f32 %v653, %v653
  %v784 = vmul.f32 %v655, %v655
  %v785 = vadd.f32 %v657, %v721
  %v786 = vadd.f32 %v658, %v722
  %v787 = vadd.f32 %v659, %v723
  %v788 = vadd.f32 %v660, %v724
  %v789 = vadd.f32 %v661, %v725
  %v790 = vadd.f32 %v662, %v726
  %v791 = vadd.f32 %v663, %v727
  %v792 = vadd.f32 %v664, %v728
  %v793 = vadd.f32 %v665, %v729
  %v794 = vadd.f32 %v666, %v730
  %v795 = vadd.f32 %v667, %v731
  %v796 = vadd.f32 %v668, %v732
  %v797 = vadd.f32 %v669, %v733
  %v798 = vadd.f32 %v670, %v734
  %v799 = vadd.f32 %v671, %v735
  %v800 = vadd.f32 %v672, %v736
  %v801 = vadd.f32 %v673, %v737
  %v802 = vadd.f32 %v674, %v738
  %v803 = vadd.f32 %v675, %v739
  %v804 = vadd.f32 %v676, %v740
  %v805 = vadd.f32 %v677, %v741
  %v806 = vadd.f32 %v678, %v742
  %v807 = vadd.f32 %v679, %v743
  %v808 = vadd.f32 %v680, %v744
  %v809 = vadd.f32 %v681, %v745
  %v810 = vadd.f32 %v682, %v746
  %v811 = vadd.f32 %v683, %v747
  %v812 = vadd.f32 %v684, %v748
  %v813 = vadd.f32 %v685, %v749
  %v814 = vadd.f32 %v686, %v750
  %v815 = vadd.f32 %v687, %v751
  %v816 = vadd.f32 %v688, %v752
  %v817 = vadd.f32 %v689, %v753
  %v818 = vadd.f32 %v690, %v754
  %v819 = vadd.f32 %v691, %v755
  %v820 = vadd.f32 %v692, %v756
  %v821 = vadd.f32 %v693, %v757
  %v822 = vadd.f32 %v694, %v758
  %v823 = vadd.f32 %v695, %v759
  %v824 = vadd.f32 %v696, %v760
  %v825 = vadd.f32 %v697, %v761
  %v826 = vadd.f32 %v698, %v762
  %v827 = vadd.f32 %v699, %v763
  %v828 = vadd.f32 %v700, %v764
  %v829 = vadd.f32 %v701, %v765
  %v830 = vadd.f32 %v702, %v766
  %v831 = vadd.f32 %v703, %v767
  %v832 = vadd.f32 %v704, %v768
  %v833 = vadd.f32 %v705, %v769
  %v834 = vadd.f32 %v706, %v770
  %v835 = vadd.f32 %v707, %v771
  %v836 = vadd.f32 %v708, %v772
  %v837 = vadd.f32 %v709, %v773
  %v838 = vadd.f32 %v710, %v774
  %v839 = vadd.f32 %v711, %v775
  %v840 = vadd.f32 %v712, %v776
  %v841 = vadd.f32 %v713, %v777
  %v842 = vadd.f32 %v714, %v778
  %v843 = vadd.f32 %v715, %v779
  %v844 = vadd.f32 %v716, %v780
  %v845 = vadd.f32 %v717, %v781
  %v846 = vadd.f32 %v718, %v782
  %v847 = vadd.f32 %v719, %v783
  %v848 = vadd.f32 %v720, %v784
  %v849 = vmax.f32 %v785, %v789
  %v850 = vmax.f32 %v786, %v790
  %v851 = vmax.f32 %v787, %v791
  %v852 = vmax.f32 %v788, %v792
  %v853 = vmax.f32 %v849, %v793
  %v854 = vmax.f32 %v850, %v794
  %v855 = vmax.f32 %v851, %v795
  %v856 = vmax.f32 %v852, %v796
  %v857 = vmax.f32 %v853, %v797
  %v858 = vmax.f32 %v854, %v798
  %v859 = vmax.f32 %v855, %v799
  %v860 = vmax.f32 %v856, %v800
  %v861 = vmax.f32 %v857, %v801
  %v862 = vmax.f32 %v858, %v802
  %v863 = vmax.f32 %v859, %v803
  %v864 = vmax.f32 %v860, %v804
  %v865 = vmax.f32 %v861, %v805
  %v866 = vmax.f32 %v862, %v806
  %v867 = vmax.f32 %v863, %v807
  %v868 = vmax.f32 %v864, %v808
  %v869 = vmax.f32 %v865, %v809
  %v870 = vmax.f32 %v866, %v810
  %v871 = vmax.f32 %v867, %v811
  %v872 = vmax.f32 %v868, %v812
  %v873 = vmax.f32 %v869, %v813
  %v874 = vmax.f32 %v870, %v814
  %v875 = vmax.f32 %v871, %v815
  %v876 = vmax.f32 %v872, %v816
  %v877 = vmax.f32 %v873, %v817
  %v878 = vmax.f32 %v874, %v818
  %v879 = vmax.f32 %v875, %v819
  %v880 = vmax.f32 %v876, %v820
  %v881 = vmax.f32 %v877, %v821
  %v882 = vmax.f32 %v878, %v822
  %v883 = vmax.f32 %v879, %v823
  %v884 = vmax.f32 %v880, %v824
  %v885 = vmax.f32 %v881, %v825
  %v886 = vmax.f32 %v882, %v826
  %v887 = vmax.f32 %v883, %v827
  %v888 = vmax.f32 %v884, %v828
  %v889 = vmax.f32 %v885, %v829
  %v890 = vmax.f32 %v886, %v830
  %v891 = vmax.f32 %v887, %v831
  %v892 = vmax.f32 %v888, %v832
  %v893 = vmax.f32 %v889, %v833
  %v894 = vmax.f32 %v890, %v834
  %v895 = vmax.f32 %v891, %v835
  %v896 = vmax.f32 %v892, %v836
  %v897 = vmax.f32 %v893, %v837
  %v898 = vmax.f32 %v894, %v838
  %v899 = vmax.f32 %v895, %v839
  %v900 = vmax.f32 %v896, %v840
  %v901 = vmax.f32 %v897, %v841
  %v902 = vmax.f32 %v898, %v842
  %v903 = vmax.f32 %v899, %v843
  %v904 = vmax.f32 %v900, %v844
  %v905 = vmax.f32 %v901, %v845
  %v906 = vmax.f32 %v902, %v846
  %v907 = vmax.f32 %v903, %v847
  %v908 = vmax.f32 %v904, %v848
  %v909 = vmax.f32 %v905, %v906
  %v910 = vmax.f32 %v907, %v908
  %v911 = vmax.f32 %v909, %v910
  %912 = vmax.xlane.f32.xlu0 %v911
  %v913 = vpop.xlane.xlu0 %912
  %v914 = vrot.slane %v913, 4
  %v915 = vmax.f32 %v913, %v914
  %v916 = vrot.slane %v915, 2
  %v917 = vmax.f32 %v915, %v916
  %v918 = vrot.slane %v917, 1
  %v919 = vmax.f32 %v917, %v918
  %s920 = vtos %v919
  %s921 = smax.f32 %s920, 1e-30
  %v922 = vstv %s921
  %v923 = vrsqrt.pop %v922
  %s924 = vtos %v923
  %v925 = vstv %s924
  %v926 = vmul.f32 %v306, %v925
  %v927 = vmul.f32 %v308, %v925
  %v928 = vmul.f32 %v310, %v925
  %v929 = vmul.f32 %v312, %v925
  %v930 = vmul.f32 %v316, %v925
  %v931 = vmul.f32 %v318, %v925
  %v932 = vmul.f32 %v320, %v925
  %v933 = vmul.f32 %v322, %v925
  %v934 = vmul.f32 %v326, %v925
  %v935 = vmul.f32 %v328, %v925
  %v936 = vmul.f32 %v330, %v925
  %v937 = vmul.f32 %v332, %v925
  %v938 = vmul.f32 %v336, %v925
  %v939 = vmul.f32 %v338, %v925
  %v940 = vmul.f32 %v340, %v925
  %v941 = vmul.f32 %v342, %v925
  %v942 = vmul.f32 %v346, %v925
  %v943 = vmul.f32 %v348, %v925
  %v944 = vmul.f32 %v350, %v925
  %v945 = vmul.f32 %v352, %v925
  %v946 = vmul.f32 %v356, %v925
  %v947 = vmul.f32 %v358, %v925
  %v948 = vmul.f32 %v360, %v925
  %v949 = vmul.f32 %v362, %v925
  %v950 = vmul.f32 %v366, %v925
  %v951 = vmul.f32 %v368, %v925
  %v952 = vmul.f32 %v370, %v925
  %v953 = vmul.f32 %v372, %v925
  %v954 = vmul.f32 %v376, %v925
  %v955 = vmul.f32 %v378, %v925
  %v956 = vmul.f32 %v380, %v925
  %v957 = vmul.f32 %v382, %v925
  %v958 = vmul.f32 %v386, %v925
  %v959 = vmul.f32 %v388, %v925
  %v960 = vmul.f32 %v390, %v925
  %v961 = vmul.f32 %v392, %v925
  %v962 = vmul.f32 %v396, %v925
  %v963 = vmul.f32 %v398, %v925
  %v964 = vmul.f32 %v400, %v925
  %v965 = vmul.f32 %v402, %v925
  %v966 = vmul.f32 %v406, %v925
  %v967 = vmul.f32 %v408, %v925
  %v968 = vmul.f32 %v410, %v925
  %v969 = vmul.f32 %v412, %v925
  %v970 = vmul.f32 %v416, %v925
  %v971 = vmul.f32 %v418, %v925
  %v972 = vmul.f32 %v420, %v925
  %v973 = vmul.f32 %v422, %v925
  %v974 = vmul.f32 %v426, %v925
  %v975 = vmul.f32 %v428, %v925
  %v976 = vmul.f32 %v430, %v925
  %v977 = vmul.f32 %v432, %v925
  %v978 = vmul.f32 %v436, %v925
  %v979 = vmul.f32 %v438, %v925
  %v980 = vmul.f32 %v440, %v925
  %v981 = vmul.f32 %v442, %v925
  %v982 = vmul.f32 %v446, %v925
  %v983 = vmul.f32 %v448, %v925
  %v984 = vmul.f32 %v450, %v925
  %v985 = vmul.f32 %v452, %v925
  %v986 = vmul.f32 %v456, %v925
  %v987 = vmul.f32 %v458, %v925
  %v988 = vmul.f32 %v460, %v925
  %v989 = vmul.f32 %v462, %v925
  %990 = vst [vmem:[%s2] sm:$0xff] %v926
  %991 = vst [vmem:[%s2 + $0x8] sm:$0xff] %v927
  %992 = vst [vmem:[%s2 + $0x10] sm:$0xff] %v928
  %993 = vst [vmem:[%s2 + $0x18] sm:$0xff] %v929
  %994 = vst [vmem:[%s2 + $0x20] sm:$0xff] %v930
  %995 = vst [vmem:[%s2 + $0x28] sm:$0xff] %v931
  %996 = vst [vmem:[%s2 + $0x30] sm:$0xff] %v932
  %997 = vst [vmem:[%s2 + $0x38] sm:$0xff] %v933
  %998 = vst [vmem:[%s2 + $0x40] sm:$0xff] %v934
  %999 = vst [vmem:[%s2 + $0x48] sm:$0xff] %v935
  %1000 = vst [vmem:[%s2 + $0x50] sm:$0xff] %v936
  %1001 = vst [vmem:[%s2 + $0x58] sm:$0xff] %v937
  %1002 = vst [vmem:[%s2 + $0x60] sm:$0xff] %v938
  %1003 = vst [vmem:[%s2 + $0x68] sm:$0xff] %v939
  %1004 = vst [vmem:[%s2 + $0x70] sm:$0xff] %v940
  %1005 = vst [vmem:[%s2 + $0x78] sm:$0xff] %v941
  %1006 = vst [vmem:[%s2 + $0x80] sm:$0xff] %v942
  %1007 = vst [vmem:[%s2 + $0x88] sm:$0xff] %v943
  %1008 = vst [vmem:[%s2 + $0x90] sm:$0xff] %v944
  %1009 = vst [vmem:[%s2 + $0x98] sm:$0xff] %v945
  %1010 = vst [vmem:[%s2 + $0xa0] sm:$0xff] %v946
  %1011 = vst [vmem:[%s2 + $0xa8] sm:$0xff] %v947
  %1012 = vst [vmem:[%s2 + $0xb0] sm:$0xff] %v948
  %1013 = vst [vmem:[%s2 + $0xb8] sm:$0xff] %v949
  %1014 = vst [vmem:[%s2 + $0xc0] sm:$0xff] %v950
  %1015 = vst [vmem:[%s2 + $0xc8] sm:$0xff] %v951
  %1016 = vst [vmem:[%s2 + $0xd0] sm:$0xff] %v952
  %1017 = vst [vmem:[%s2 + $0xd8] sm:$0xff] %v953
  %1018 = vst [vmem:[%s2 + $0xe0] sm:$0xff] %v954
  %1019 = vst [vmem:[%s2 + $0xe8] sm:$0xff] %v955
  %1020 = vst [vmem:[%s2 + $0xf0] sm:$0xff] %v956
  %1021 = vst [vmem:[%s2 + $0xf8] sm:$0xff] %v957
  %1022 = vst [vmem:[%s2 + $0x100] sm:$0xff] %v958
  %1023 = vst [vmem:[%s2 + $0x108] sm:$0xff] %v959
  %1024 = vst [vmem:[%s2 + $0x110] sm:$0xff] %v960
  %1025 = vst [vmem:[%s2 + $0x118] sm:$0xff] %v961
  %1026 = vst [vmem:[%s2 + $0x120] sm:$0xff] %v962
  %1027 = vst [vmem:[%s2 + $0x128] sm:$0xff] %v963
  %1028 = vst [vmem:[%s2 + $0x130] sm:$0xff] %v964
  %1029 = vst [vmem:[%s2 + $0x138] sm:$0xff] %v965
  %1030 = vst [vmem:[%s2 + $0x140] sm:$0xff] %v966
  %1031 = vst [vmem:[%s2 + $0x148] sm:$0xff] %v967
  %1032 = vst [vmem:[%s2 + $0x150] sm:$0xff] %v968
  %1033 = vst [vmem:[%s2 + $0x158] sm:$0xff] %v969
  %1034 = vst [vmem:[%s2 + $0x160] sm:$0xff] %v970
  %1035 = vst [vmem:[%s2 + $0x168] sm:$0xff] %v971
  %1036 = vst [vmem:[%s2 + $0x170] sm:$0xff] %v972
  %1037 = vst [vmem:[%s2 + $0x178] sm:$0xff] %v973
  %1038 = vst [vmem:[%s2 + $0x180] sm:$0xff] %v974
  %1039 = vst [vmem:[%s2 + $0x188] sm:$0xff] %v975
  %1040 = vst [vmem:[%s2 + $0x190] sm:$0xff] %v976
  %1041 = vst [vmem:[%s2 + $0x198] sm:$0xff] %v977
  %1042 = vst [vmem:[%s2 + $0x1a0] sm:$0xff] %v978
  %1043 = vst [vmem:[%s2 + $0x1a8] sm:$0xff] %v979
  %1044 = vst [vmem:[%s2 + $0x1b0] sm:$0xff] %v980
  %1045 = vst [vmem:[%s2 + $0x1b8] sm:$0xff] %v981
  %1046 = vst [vmem:[%s2 + $0x1c0] sm:$0xff] %v982
  %1047 = vst [vmem:[%s2 + $0x1c8] sm:$0xff] %v983
  %1048 = vst [vmem:[%s2 + $0x1d0] sm:$0xff] %v984
  %1049 = vst [vmem:[%s2 + $0x1d8] sm:$0xff] %v985
  %1050 = vst [vmem:[%s2 + $0x1e0] sm:$0xff] %v986
  %1051 = vst [vmem:[%s2 + $0x1e8] sm:$0xff] %v987
  %1052 = vst [vmem:[%s2 + $0x1f0] sm:$0xff] %v988
  %1053 = vst [vmem:[%s2 + $0x1f8] sm:$0xff] %v989
  %v1054 = vmul.f32 %v499, %v925
  %v1055 = vmul.f32 %v501, %v925
  %v1056 = vmul.f32 %v503, %v925
  %v1057 = vmul.f32 %v505, %v925
  %v1058 = vmul.f32 %v509, %v925
  %v1059 = vmul.f32 %v511, %v925
  %v1060 = vmul.f32 %v513, %v925
  %v1061 = vmul.f32 %v515, %v925
  %v1062 = vmul.f32 %v519, %v925
  %v1063 = vmul.f32 %v521, %v925
  %v1064 = vmul.f32 %v523, %v925
  %v1065 = vmul.f32 %v525, %v925
  %v1066 = vmul.f32 %v529, %v925
  %v1067 = vmul.f32 %v531, %v925
  %v1068 = vmul.f32 %v533, %v925
  %v1069 = vmul.f32 %v535, %v925
  %v1070 = vmul.f32 %v539, %v925
  %v1071 = vmul.f32 %v541, %v925
  %v1072 = vmul.f32 %v543, %v925
  %v1073 = vmul.f32 %v545, %v925
  %v1074 = vmul.f32 %v549, %v925
  %v1075 = vmul.f32 %v551, %v925
  %v1076 = vmul.f32 %v553, %v925
  %v1077 = vmul.f32 %v555, %v925
  %v1078 = vmul.f32 %v559, %v925
  %v1079 = vmul.f32 %v561, %v925
  %v1080 = vmul.f32 %v563, %v925
  %v1081 = vmul.f32 %v565, %v925
  %v1082 = vmul.f32 %v569, %v925
  %v1083 = vmul.f32 %v571, %v925
  %v1084 = vmul.f32 %v573, %v925
  %v1085 = vmul.f32 %v575, %v925
  %v1086 = vmul.f32 %v579, %v925
  %v1087 = vmul.f32 %v581, %v925
  %v1088 = vmul.f32 %v583, %v925
  %v1089 = vmul.f32 %v585, %v925
  %v1090 = vmul.f32 %v589, %v925
  %v1091 = vmul.f32 %v591, %v925
  %v1092 = vmul.f32 %v593, %v925
  %v1093 = vmul.f32 %v595, %v925
  %v1094 = vmul.f32 %v599, %v925
  %v1095 = vmul.f32 %v601, %v925
  %v1096 = vmul.f32 %v603, %v925
  %v1097 = vmul.f32 %v605, %v925
  %v1098 = vmul.f32 %v609, %v925
  %v1099 = vmul.f32 %v611, %v925
  %v1100 = vmul.f32 %v613, %v925
  %v1101 = vmul.f32 %v615, %v925
  %v1102 = vmul.f32 %v619, %v925
  %v1103 = vmul.f32 %v621, %v925
  %v1104 = vmul.f32 %v623, %v925
  %v1105 = vmul.f32 %v625, %v925
  %v1106 = vmul.f32 %v629, %v925
  %v1107 = vmul.f32 %v631, %v925
  %v1108 = vmul.f32 %v633, %v925
  %v1109 = vmul.f32 %v635, %v925
  %v1110 = vmul.f32 %v639, %v925
  %v1111 = vmul.f32 %v641, %v925
  %v1112 = vmul.f32 %v643, %v925
  %v1113 = vmul.f32 %v645, %v925
  %v1114 = vmul.f32 %v649, %v925
  %v1115 = vmul.f32 %v651, %v925
  %v1116 = vmul.f32 %v653, %v925
  %v1117 = vmul.f32 %v655, %v925
  %1118 = vst [vmem:[%s3] sm:$0xff] %v1054
  %1119 = vst [vmem:[%s3 + $0x8] sm:$0xff] %v1055
  %1120 = vst [vmem:[%s3 + $0x10] sm:$0xff] %v1056
  %1121 = vst [vmem:[%s3 + $0x18] sm:$0xff] %v1057
  %1122 = vst [vmem:[%s3 + $0x20] sm:$0xff] %v1058
  %1123 = vst [vmem:[%s3 + $0x28] sm:$0xff] %v1059
  %1124 = vst [vmem:[%s3 + $0x30] sm:$0xff] %v1060
  %1125 = vst [vmem:[%s3 + $0x38] sm:$0xff] %v1061
  %1126 = vst [vmem:[%s3 + $0x40] sm:$0xff] %v1062
  %1127 = vst [vmem:[%s3 + $0x48] sm:$0xff] %v1063
  %1128 = vst [vmem:[%s3 + $0x50] sm:$0xff] %v1064
  %1129 = vst [vmem:[%s3 + $0x58] sm:$0xff] %v1065
  %1130 = vst [vmem:[%s3 + $0x60] sm:$0xff] %v1066
  %1131 = vst [vmem:[%s3 + $0x68] sm:$0xff] %v1067
  %1132 = vst [vmem:[%s3 + $0x70] sm:$0xff] %v1068
  %1133 = vst [vmem:[%s3 + $0x78] sm:$0xff] %v1069
  %1134 = vst [vmem:[%s3 + $0x80] sm:$0xff] %v1070
  %1135 = vst [vmem:[%s3 + $0x88] sm:$0xff] %v1071
  %1136 = vst [vmem:[%s3 + $0x90] sm:$0xff] %v1072
  %1137 = vst [vmem:[%s3 + $0x98] sm:$0xff] %v1073
  %1138 = vst [vmem:[%s3 + $0xa0] sm:$0xff] %v1074
  %1139 = vst [vmem:[%s3 + $0xa8] sm:$0xff] %v1075
  %1140 = vst [vmem:[%s3 + $0xb0] sm:$0xff] %v1076
  %1141 = vst [vmem:[%s3 + $0xb8] sm:$0xff] %v1077
  %1142 = vst [vmem:[%s3 + $0xc0] sm:$0xff] %v1078
  %1143 = vst [vmem:[%s3 + $0xc8] sm:$0xff] %v1079
  %1144 = vst [vmem:[%s3 + $0xd0] sm:$0xff] %v1080
  %1145 = vst [vmem:[%s3 + $0xd8] sm:$0xff] %v1081
  %1146 = vst [vmem:[%s3 + $0xe0] sm:$0xff] %v1082
  %1147 = vst [vmem:[%s3 + $0xe8] sm:$0xff] %v1083
  %1148 = vst [vmem:[%s3 + $0xf0] sm:$0xff] %v1084
  %1149 = vst [vmem:[%s3 + $0xf8] sm:$0xff] %v1085
  %1150 = vst [vmem:[%s3 + $0x100] sm:$0xff] %v1086
  %1151 = vst [vmem:[%s3 + $0x108] sm:$0xff] %v1087
  %1152 = vst [vmem:[%s3 + $0x110] sm:$0xff] %v1088
  %1153 = vst [vmem:[%s3 + $0x118] sm:$0xff] %v1089
  %1154 = vst [vmem:[%s3 + $0x120] sm:$0xff] %v1090
  %1155 = vst [vmem:[%s3 + $0x128] sm:$0xff] %v1091
  %1156 = vst [vmem:[%s3 + $0x130] sm:$0xff] %v1092
  %1157 = vst [vmem:[%s3 + $0x138] sm:$0xff] %v1093
  %1158 = vst [vmem:[%s3 + $0x140] sm:$0xff] %v1094
  %1159 = vst [vmem:[%s3 + $0x148] sm:$0xff] %v1095
  %1160 = vst [vmem:[%s3 + $0x150] sm:$0xff] %v1096
  %1161 = vst [vmem:[%s3 + $0x158] sm:$0xff] %v1097
  %1162 = vst [vmem:[%s3 + $0x160] sm:$0xff] %v1098
  %1163 = vst [vmem:[%s3 + $0x168] sm:$0xff] %v1099
  %1164 = vst [vmem:[%s3 + $0x170] sm:$0xff] %v1100
  %1165 = vst [vmem:[%s3 + $0x178] sm:$0xff] %v1101
  %1166 = vst [vmem:[%s3 + $0x180] sm:$0xff] %v1102
  %1167 = vst [vmem:[%s3 + $0x188] sm:$0xff] %v1103
  %1168 = vst [vmem:[%s3 + $0x190] sm:$0xff] %v1104
  %1169 = vst [vmem:[%s3 + $0x198] sm:$0xff] %v1105
  %1170 = vst [vmem:[%s3 + $0x1a0] sm:$0xff] %v1106
  %1171 = vst [vmem:[%s3 + $0x1a8] sm:$0xff] %v1107
  %1172 = vst [vmem:[%s3 + $0x1b0] sm:$0xff] %v1108
  %1173 = vst [vmem:[%s3 + $0x1b8] sm:$0xff] %v1109
  %1174 = vst [vmem:[%s3 + $0x1c0] sm:$0xff] %v1110
  %1175 = vst [vmem:[%s3 + $0x1c8] sm:$0xff] %v1111
  %1176 = vst [vmem:[%s3 + $0x1d0] sm:$0xff] %v1112
  %1177 = vst [vmem:[%s3 + $0x1d8] sm:$0xff] %v1113
  %1178 = vst [vmem:[%s3 + $0x1e0] sm:$0xff] %v1114
  %1179 = vst [vmem:[%s3 + $0x1e8] sm:$0xff] %v1115
  %1180 = vst [vmem:[%s3 + $0x1f0] sm:$0xff] %v1116
  %1181 = vst [vmem:[%s3 + $0x1f8] sm:$0xff] %v1117
  // Predicated region
  $region10: #{_forward_impl.1} parent=0 // pred_check
    _
  $region11: #{_forward_impl.1} parent=0 // pred_check_branch
    %1183 = sbr.rel (0) target = $region13
  $region12: #{_forward_impl.1} parent=0 // pred_region
    _
  $region13: #{_forward_impl.1} parent=0 // pred_fallthru
    _
  // Predicated region
  $region14: #{_forward_impl.1} parent=0 // pred_check
    _
  $region15: #{_forward_impl.1} parent=0 // pred_check_branch
    %1185 = sbr.rel (0) target = $region17
  $region16: #{_forward_impl.1} parent=0 // pred_region
    _
  $region17: #{_forward_impl.1} parent=0 // pred_fallthru
    _
  // Predicated region
  $region18: #{_forward_impl.1} parent=0 // pred_check
    _
  $region19: #{_forward_impl.1} parent=0 // pred_check_branch
    %1187 = sbr.rel (0) target = $region21
  $region20: #{_forward_impl.1} parent=0 // pred_region
    _
  $region21: #{_forward_impl.1} parent=0 // pred_fallthru
    _
  // Predicated region
  $region22: #{_forward_impl.1} parent=0 // pred_check
    _
  $region23: #{_forward_impl.1} parent=0 // pred_check_branch
    %1189 = sbr.rel (0) target = $region25
  $region24: #{_forward_impl.1} parent=0 // pred_region
    _
  $region25: #{_forward_impl.1} parent=0 // pred_fallthru
    _

</llo_original>
